<compile_context>
chip_gen: v7x
topology: tpu7x:2x2x1
jax: 0.10.0
libtpu: 0.0.40
codegen_flags: <defaults>
</compile_context>

<pallas_src>
import functools

import jax
import jax.numpy as jnp
from jax.experimental import pallas as pl
from jax.experimental import pallas as _pl_unused  # noqa: F401
from jax.experimental.pallas import tpu as pltpu   # noqa: F401  (not needed: no grid / default VMEM is plenty)


# ---------------------------------------------------------------------------
# Fused Pallas kernel: entire CNNForecasting forward, single launch, no grid.
# ---------------------------------------------------------------------------
def _fused_cnn_kernel(x_ref, w_ref, o_ref, *, layer_cfg, batch, c_last):
    """Whole-array VMEM refs:

    x_ref : (B*C_in0, L)        batch folded onto sublanes, time on lanes
    w_ref : (n_layers+1, R, C)  page i < n_layers: combined layer-i weight
                                (conv taps + skip + biases); last page holds the
                                tiled 1x1 output weight (col 0) and bias ([0,1]).
    o_ref : (B, L_final)        lane-dense output slab
    """
    n_layers = len(layer_cfg)
    x = x_ref[...]                                        # (B*C_in0, L) f32

    for i, (ks, dil, cin, cout) in enumerate(layer_cfg):
        trim = dil * (ks - 1)
        l_out = x.shape[1] - trim
        rows = 2 * batch * cout
        cols = ks * batch * cin + 1
        w = w_ref[i][0:rows, 0:cols]                      # static slice of the padded page

        # im2col: K lane-shifted views stacked on sublanes + a ones row that
        # carries both biases through the same matmul.
        taps = [x[:, j * dil: j * dil + l_out] for j in range(ks)]
        taps.append(jnp.ones((1, l_out), jnp.float32))
        xs = jnp.concatenate(taps, axis=0)                # (K*B*cin + 1, L_out)

        # One MXU pass per layer:
        #   rows [0, B*cout)         -> dilated conv (+ bias)
        #   rows [B*cout, 2*B*cout)  -> skip 1x1 conv on x[:, trim:] (+ bias)
        z = jnp.dot(w, xs, preferred_element_type=jnp.float32)
        z_conv = z[0:batch * cout, :]
        z_skip = z[batch * cout:, :]
        x = jnp.where(z_conv > 0, z_conv, 0.1 * z_conv) + z_skip   # LeakyReLU(0.1)

    # Output 1x1 conv (single output channel): VPU broadcast-multiply + a
    # per-batch sublane reduce instead of a degenerate few-row MXU pass.
    w_last = w_ref[n_layers]
    w_o = w_last[0:batch * c_last, 0:1]                   # (B*C_last, 1)
    b_o = w_last[0:1, 1:2]                                # (1, 1)
    prod = w_o * x                                        # (B*C_last, L_final)
    y = prod.reshape(batch, c_last, x.shape[1]).sum(axis=1) + b_o
    o_ref[...] = y.astype(o_ref.dtype)                    # one (B, L_final) store


# ---------------------------------------------------------------------------
# Wrapper: builds the packed block-diagonal weight slab, one pallas_call.
# ---------------------------------------------------------------------------
def cnn_forecasting_forward(x_ncl, layers, w_out, b_out):
    """x_ncl: (B, C_in0, L) exactly like the PyTorch module's NCL input."""
    B, c0, L = x_ncl.shape
    n_layers = len(layers)
    layer_cfg = tuple(
        (p["ks"], p["dil"], p["w_conv"].shape[2], p["w_conv"].shape[1])
        for p in layers)                                  # (ks, dil, cin, cout)
    c_last = layer_cfg[-1][3]
    L_final = L
    for ks, dil, _, _ in layer_cfg:
        L_final -= dil * (ks - 1)

    # --- combined per-layer weights (done once in the wrapper, tiny) --------
    eye = jnp.eye(B, dtype=jnp.float32)
    combos = []
    for p, (ks, dil, cin, cout) in zip(layers, layer_cfg):
        rows = 2 * B * cout
        cols = ks * B * cin + 1
        w = jnp.zeros((rows, cols), jnp.float32)
        for j in range(ks):
            w = w.at[:B * cout, j * B * cin:(j + 1) * B * cin].set(
                jnp.kron(eye, p["w_conv"][j]))            # block-diag over batch
        # skip 1x1 conv reads x[:, trim:], i.e. exactly the last tap slice:
        w = w.at[B * cout:, (ks - 1) * B * cin: ks * B * cin].set(
            jnp.kron(eye, p["w_skip"]))
        # biases ride the trailing ones row of the im2col stack:
        w = w.at[:B * cout, -1].set(jnp.tile(p["b_conv"].reshape(-1), B))
        w = w.at[B * cout:, -1].set(jnp.tile(p["b_skip"].reshape(-1), B))
        combos.append(w)

    r_max = max(max(w.shape[0] for w in combos), B * c_last)
    c_max = max(max(w.shape[1] for w in combos), 2)
    slab = jnp.zeros((n_layers + 1, r_max, c_max), jnp.float32)
    for i, w in enumerate(combos):
        slab = slab.at[i, :w.shape[0], :w.shape[1]].set(w)
    slab = slab.at[n_layers, :B * c_last, 0].set(jnp.tile(w_out.reshape(-1), B))
    slab = slab.at[n_layers, 0, 1].set(b_out.reshape(()))

    # batch folded onto sublanes (contiguous in NCL, so this reshape is free)
    x2d = x_ncl.reshape(B * c0, L)

    # --- cost estimate (hint only) ------------------------------------------
    flops = 0
    lc = L
    for ks, dil, cin, cout in layer_cfg:
        lc -= dil * (ks - 1)
        flops += 2 * B * cout * (ks * cin + cin) * lc     # dilated conv + skip
    flops += 2 * B * c_last * L_final                     # output 1x1
    bytes_accessed = 4 * (int(x2d.size) + int(slab.size) + B * L_final)

    kern = functools.partial(_fused_cnn_kernel, layer_cfg=layer_cfg,
                             batch=B, c_last=c_last)
    out = pl.pallas_call(
        kern,
        out_shape=jax.ShapeDtypeStruct((B, L_final), x_ncl.dtype),
        # No grid / no BlockSpecs: every operand is a whole-array VMEM block;
        # the fused network runs as a single latency-bound launch with only
        # two inputs (activations + packed weight slab).
        cost_estimate=pl.CostEstimate(flops=int(flops), transcendentals=0,
                                      bytes_accessed=int(bytes_accessed)),
    )(x2d, slab)
    return out.reshape(-1, 1)                 # matches torch `x.reshape(-1, 1)`


# ---------------------------------------------------------------------------
# Parameter init (deterministic, matches kaiming_normal_ + zero bias).
# ---------------------------------------------------------------------------
def init_cnn_forecasting(key, num_layers, in_channels, out_channels,
                         kernel_sizes):
    dilations = [2 ** i for i in range(num_layers - 1)] + [3]
    layers = []
    for i in range(num_layers):
        key, k1, k2 = jax.random.split(key, 3)
        cin, cout, ks = in_channels[i], out_channels[i], kernel_sizes[i]
        std_c = (2.0 / (cin * ks)) ** 0.5                 # kaiming, fan_in
        w_conv = std_c * jax.random.normal(k1, (ks, cout, cin), jnp.float32)
        std_s = (2.0 / cin) ** 0.5
        w_skip = std_s * jax.random.normal(k2, (cout, cin), jnp.float32)
        layers.append(dict(w_conv=w_conv,
                           b_conv=jnp.zeros((cout, 1), jnp.float32),
                           w_skip=w_skip,
                           b_skip=jnp.zeros((cout, 1), jnp.float32),
                           ks=ks, dil=dilations[i]))
    key, k3 = jax.random.split(key)
    std_o = (2.0 / out_channels[-1]) ** 0.5
    w_out = std_o * jax.random.normal(k3, (1, out_channels[-1]), jnp.float32)
    b_out = jnp.zeros((1, 1), jnp.float32)
    return layers, w_out, b_out


# ---------------------------------------------------------------------------
# Pure-JAX reference (same math as the PyTorch module) for validation.
# ---------------------------------------------------------------------------
def cnn_forecasting_ref(x_ncl, layers, w_out, b_out):
    x = x_ncl                                             # (B, C, L)
    for p in layers:
        d, k = p["dil"], p["ks"]
        trim = d * (k - 1)
        L_out = x.shape[2] - trim
        acc = p["b_conv"][None]                           # (1, C_out, 1)
        for j in range(k):
            acc = acc + jnp.einsum("oc,bcl->bol", p["w_conv"][j],
                                   x[:, :, j * d: j * d + L_out])
        x1 = jnp.where(acc > 0, acc, 0.1 * acc)
        skip = (jnp.einsum("oc,bcl->bol", p["w_skip"], x[:, :, trim:])
                + p["b_skip"][None])
        x = x1 + skip
    y = jnp.einsum("oc,bcl->bol", w_out, x) + b_out[None]
    return y.reshape(-1, 1)


# ---------------------------------------------------------------------------
if __name__ == "__main__":
    # Small config consistent with the module: num_layers=3 -> dilations [1,2,3]
    num_layers = 3
    in_channels = [4, 8, 8]
    out_channels = [8, 8, 8]
    kernel_sizes = [3, 3, 3]
    B, L = 2, 32                                          # input (B, C_in, L)

    key = jax.random.PRNGKey(0)
    key, kx = jax.random.split(key)
    x = jax.random.normal(kx, (B, in_channels[0], L), jnp.float32)

    layers, w_out, b_out = init_cnn_forecasting(
        key, num_layers, in_channels, out_channels, kernel_sizes)

    out = cnn_forecasting_forward(x, layers, w_out, b_out)
    out = jax.block_until_ready(out)

    ref = cnn_forecasting_ref(x, layers, w_out, b_out)
    assert out.shape == ref.shape, (out.shape, ref.shape)
    assert jnp.allclose(out, ref, atol=1e-4, rtol=1e-4), \
        float(jnp.max(jnp.abs(out - ref)))

    print("KERNEL_OK")
</pallas_src>

<mosaic_0001>
module attributes {stable_mosaic.version = 11 : i64} {
  func.func @_fused_cnn_kernel(%arg0: memref<8x32xf32, #tpu.memory_space<vmem>>, %arg1: memref<4x32x49xf32, #tpu.memory_space<vmem>>, %arg2: memref<2x20xf32, #tpu.memory_space<vmem>>) attributes {dimension_semantics = [], scalar_prefetch = 0 : i64, scratch_operands = 0 : i64, tpu.core_type = #tpu.core_type<tc>} {
    %c0 = arith.constant 0 : index
    %c0_0 = arith.constant 0 : index
    %0 = vector.load %arg0[%c0, %c0_0] : memref<8x32xf32, #tpu.memory_space<vmem>>, vector<8x32xf32>
    %c0_1 = arith.constant 0 : index
    %c0_2 = arith.constant 0 : index
    %c0_3 = arith.constant 0 : index
    %1 = vector.load %arg1[%c0_1, %c0_2, %c0_3] : memref<4x32x49xf32, #tpu.memory_space<vmem>>, vector<1x32x49xf32>
    %2 = vector.shape_cast %1 : vector<1x32x49xf32> to vector<32x49xf32>
    %3 = vector.extract_strided_slice %2 {offsets = [0, 0], sizes = [32, 25], strides = [1, 1]} : vector<32x49xf32> to vector<32x25xf32>
    %4 = vector.extract_strided_slice %0 {offsets = [0, 0], sizes = [8, 30], strides = [1, 1]} : vector<8x32xf32> to vector<8x30xf32>
    %5 = vector.extract_strided_slice %0 {offsets = [0, 1], sizes = [8, 30], strides = [1, 1]} : vector<8x32xf32> to vector<8x30xf32>
    %6 = vector.extract_strided_slice %0 {offsets = [0, 2], sizes = [8, 30], strides = [1, 1]} : vector<8x32xf32> to vector<8x30xf32>
    %cst = arith.constant 1.000000e+00 : f32
    %7 = vector.broadcast %cst : f32 to vector<1x30xf32>
    %8 = tpu.concatenate %4, %5, %6, %7 in 0 : vector<8x30xf32>, vector<8x30xf32>, vector<8x30xf32>, vector<1x30xf32> -> vector<25x30xf32>
    %cst_4 = arith.constant dense<0.000000e+00> : vector<32x30xf32>
    %9 = tpu.matmul %3, %8, %cst_4 {dimension_numbers = #tpu.dot_dimension_numbers<[1], [0], [0], [1], [0, 0, 1, 1], [], []>} : vector<32x25xf32>, vector<25x30xf32>, vector<32x30xf32> -> vector<32x30xf32>
    %10 = vector.extract_strided_slice %9 {offsets = [0, 0], sizes = [16, 30], strides = [1, 1]} : vector<32x30xf32> to vector<16x30xf32>
    %11 = vector.extract_strided_slice %9 {offsets = [16, 0], sizes = [16, 30], strides = [1, 1]} : vector<32x30xf32> to vector<16x30xf32>
    %cst_5 = arith.constant 0.000000e+00 : f32
    %12 = vector.broadcast %cst_5 : f32 to vector<16x30xf32>
    %13 = arith.cmpf ogt, %10, %12 : vector<16x30xf32>
    %cst_6 = arith.constant 1.000000e-01 : f32
    %14 = vector.broadcast %cst_6 : f32 to vector<16x30xf32>
    %15 = arith.mulf %14, %10 : vector<16x30xf32>
    %16 = arith.select %13, %10, %15 : vector<16x30xi1>, vector<16x30xf32>
    %17 = arith.addf %16, %11 : vector<16x30xf32>
    %c1 = arith.constant 1 : index
    %c0_7 = arith.constant 0 : index
    %c0_8 = arith.constant 0 : index
    %18 = vector.load %arg1[%c1, %c0_7, %c0_8] : memref<4x32x49xf32, #tpu.memory_space<vmem>>, vector<1x32x49xf32>
    %19 = vector.shape_cast %18 : vector<1x32x49xf32> to vector<32x49xf32>
    %20 = vector.extract_strided_slice %17 {offsets = [0, 0], sizes = [16, 26], strides = [1, 1]} : vector<16x30xf32> to vector<16x26xf32>
    %21 = vector.extract_strided_slice %17 {offsets = [0, 2], sizes = [16, 26], strides = [1, 1]} : vector<16x30xf32> to vector<16x26xf32>
    %22 = vector.extract_strided_slice %17 {offsets = [0, 4], sizes = [16, 26], strides = [1, 1]} : vector<16x30xf32> to vector<16x26xf32>
    %cst_9 = arith.constant 1.000000e+00 : f32
    %23 = vector.broadcast %cst_9 : f32 to vector<1x26xf32>
    %24 = tpu.concatenate %20, %21, %22, %23 in 0 : vector<16x26xf32>, vector<16x26xf32>, vector<16x26xf32>, vector<1x26xf32> -> vector<49x26xf32>
    %cst_10 = arith.constant dense<0.000000e+00> : vector<32x26xf32>
    %25 = tpu.matmul %19, %24, %cst_10 {dimension_numbers = #tpu.dot_dimension_numbers<[1], [0], [0], [1], [0, 0, 1, 1], [], []>} : vector<32x49xf32>, vector<49x26xf32>, vector<32x26xf32> -> vector<32x26xf32>
    %26 = vector.extract_strided_slice %25 {offsets = [0, 0], sizes = [16, 26], strides = [1, 1]} : vector<32x26xf32> to vector<16x26xf32>
    %27 = vector.extract_strided_slice %25 {offsets = [16, 0], sizes = [16, 26], strides = [1, 1]} : vector<32x26xf32> to vector<16x26xf32>
    %cst_11 = arith.constant 0.000000e+00 : f32
    %28 = vector.broadcast %cst_11 : f32 to vector<16x26xf32>
    %29 = arith.cmpf ogt, %26, %28 : vector<16x26xf32>
    %cst_12 = arith.constant 1.000000e-01 : f32
    %30 = vector.broadcast %cst_12 : f32 to vector<16x26xf32>
    %31 = arith.mulf %30, %26 : vector<16x26xf32>
    %32 = arith.select %29, %26, %31 : vector<16x26xi1>, vector<16x26xf32>
    %33 = arith.addf %32, %27 : vector<16x26xf32>
    %c2 = arith.constant 2 : index
    %c0_13 = arith.constant 0 : index
    %c0_14 = arith.constant 0 : index
    %34 = vector.load %arg1[%c2, %c0_13, %c0_14] : memref<4x32x49xf32, #tpu.memory_space<vmem>>, vector<1x32x49xf32>
    %35 = vector.shape_cast %34 : vector<1x32x49xf32> to vector<32x49xf32>
    %36 = vector.extract_strided_slice %33 {offsets = [0, 0], sizes = [16, 20], strides = [1, 1]} : vector<16x26xf32> to vector<16x20xf32>
    %37 = vector.extract_strided_slice %33 {offsets = [0, 3], sizes = [16, 20], strides = [1, 1]} : vector<16x26xf32> to vector<16x20xf32>
    %38 = vector.extract_strided_slice %33 {offsets = [0, 6], sizes = [16, 20], strides = [1, 1]} : vector<16x26xf32> to vector<16x20xf32>
    %cst_15 = arith.constant 1.000000e+00 : f32
    %39 = vector.broadcast %cst_15 : f32 to vector<1x20xf32>
    %40 = tpu.concatenate %36, %37, %38, %39 in 0 : vector<16x20xf32>, vector<16x20xf32>, vector<16x20xf32>, vector<1x20xf32> -> vector<49x20xf32>
    %cst_16 = arith.constant dense<0.000000e+00> : vector<32x20xf32>
    %41 = tpu.matmul %35, %40, %cst_16 {dimension_numbers = #tpu.dot_dimension_numbers<[1], [0], [0], [1], [0, 0, 1, 1], [], []>} : vector<32x49xf32>, vector<49x20xf32>, vector<32x20xf32> -> vector<32x20xf32>
    %42 = vector.extract_strided_slice %41 {offsets = [0, 0], sizes = [16, 20], strides = [1, 1]} : vector<32x20xf32> to vector<16x20xf32>
    %43 = vector.extract_strided_slice %41 {offsets = [16, 0], sizes = [16, 20], strides = [1, 1]} : vector<32x20xf32> to vector<16x20xf32>
    %cst_17 = arith.constant 0.000000e+00 : f32
    %44 = vector.broadcast %cst_17 : f32 to vector<16x20xf32>
    %45 = arith.cmpf ogt, %42, %44 : vector<16x20xf32>
    %cst_18 = arith.constant 1.000000e-01 : f32
    %46 = vector.broadcast %cst_18 : f32 to vector<16x20xf32>
    %47 = arith.mulf %46, %42 : vector<16x20xf32>
    %48 = arith.select %45, %42, %47 : vector<16x20xi1>, vector<16x20xf32>
    %49 = arith.addf %48, %43 : vector<16x20xf32>
    %c3 = arith.constant 3 : index
    %c0_19 = arith.constant 0 : index
    %c0_20 = arith.constant 0 : index
    %50 = vector.load %arg1[%c3, %c0_19, %c0_20] : memref<4x32x49xf32, #tpu.memory_space<vmem>>, vector<1x32x49xf32>
    %51 = vector.shape_cast %50 : vector<1x32x49xf32> to vector<32x49xf32>
    %52 = vector.extract_strided_slice %51 {offsets = [0, 0], sizes = [16, 1], strides = [1, 1]} : vector<32x49xf32> to vector<16x1xf32>
    %53 = vector.extract_strided_slice %51 {offsets = [0, 1], sizes = [1, 1], strides = [1, 1]} : vector<32x49xf32> to vector<1x1xf32>
    %54 = vector.broadcast %52 : vector<16x1xf32> to vector<16x20xf32>
    %55 = arith.mulf %54, %49 : vector<16x20xf32>
    %56 = vector.shape_cast %55 : vector<16x20xf32> to vector<2x8x20xf32>
    %cst_21 = arith.constant dense<0.000000e+00> : vector<2x20xf32>
    %57 = vector.multi_reduction <add>, %56, %cst_21 [1] : vector<2x8x20xf32> to vector<2x20xf32>
    %58 = vector.broadcast %53 : vector<1x1xf32> to vector<2x20xf32>
    %59 = arith.addf %57, %58 : vector<2x20xf32>
    %c0_22 = arith.constant 0 : index
    %c0_23 = arith.constant 0 : index
    %60 = vector.load %arg2[%c0_22, %c0_23] : memref<2x20xf32, #tpu.memory_space<vmem>>, vector<2x20xf32>
    tpu.vector_store %arg2[%c0_22, %c0_23], %59 {strides = array<i32>} : memref<2x20xf32, #tpu.memory_space<vmem>>, vector<2x20xf32>,
    return
  }
}

</mosaic_0001>

<llo_original>
// kernel: tpu_custom_call.1
$region0: #{tpu_custom_call.1}
  #allocation0 [shape = 'u32[]', space=smem, size = 0x4, offset = 0x4, fixed_abs, tag = 'smem constant byte address 0x4 - core index']
  #allocation1 [shape = 'u32[144,128]{1,0:T(1,128)}', space=vmem, size = 0x12000, scoped, tag = 'internal scratch']
  %s0 = inlined_call_operand.hbm [shape: f32[8,32], index: 0, kind: input, shape index: {}]
  %s1 = inlined_call_operand.hbm [shape: f32[4,32,49], index: 1, kind: input, shape index: {}]
  %s2 = inlined_call_operand.hbm [shape: f32[2,20], index: 2, kind: output, shape index: {}]
  %s3 = sld [smem:[#allocation0]]
  $region26: #{tpu_custom_call.1} parent=0
    _
  %s5 = ssub.s32 1, %s3
  %s6 = scalar_select 0, %s5, %s3
  $region1: #{tpu_custom_call.1} parent=0
    #allocation2 [shape = 'u8[4096]{0}', space=vmem, size = 0x1000, scoped, tag = 'input window, operand 0, single buffered']
    #allocation3 [shape = 's32[1]{0}', space=sflag, size = 0x4, scoped, tag = 'scoped memory for tpu_custom_call.1']
    #allocation4 [shape = 's32[1]{0}', space=sflag, size = 0x4, scoped, tag = 'scoped memory for tpu_custom_call.1']
    #allocation5 [shape = 'u8[65536]{0}', space=vmem, size = 0x10000, scoped, tag = 'input window, operand 1, single buffered']
    #allocation6 [shape = 's32[1]{0}', space=sflag, size = 0x4, scoped, tag = 'scoped memory for tpu_custom_call.1']
    #allocation7 [shape = 'u8[1024]{0}', space=vmem, size = 0x400, scoped, tag = 'output window, operand 0, single buffered']
    %7 = vsyncpa [#allocation3], 0
    %8 = vsyncpa [#allocation6], 0
    %9 = vsyncpa [#allocation4], 0
    // Predicated region
    $region2: #{tpu_custom_call.1} parent=1 // pred_check
      _
    $region3: #{tpu_custom_call.1} parent=1 // pred_check_branch
      %11 = sbr.rel (0) target = $region5
    $region4: #{tpu_custom_call.1} parent=1 // pred_region
      %s13 = ssub.s32 128, 128
      %14 = vsyncadd [#allocation3], %s13
      %s16 = sshll.u32 [#allocation2], 4
      %s17 = int_to_ptr.vmem [resolvable:$true] %s16
      %19 = dma.hbm_to_vmem [thread:$0]  %s0, 128, %s17, [#allocation3]
    $region5: #{tpu_custom_call.1} parent=1 // pred_fallthru
      _
    // Predicated region
    $region6: #{tpu_custom_call.1} parent=1 // pred_check
      _
    $region7: #{tpu_custom_call.1} parent=1 // pred_check_branch
      %21 = sbr.rel (0) target = $region9
    $region8: #{tpu_custom_call.1} parent=1 // pred_region
      %s23 = ssub.s32 2048, 2048
      %24 = vsyncadd [#allocation6], %s23
      %s25 = sshll.u32 [#allocation5], 4
      %s26 = int_to_ptr.vmem [resolvable:$true] %s25
      %31 = dma.hbm_to_vmem [thread:$0]  %s1, 2048, %s26, [#allocation6], 128, 128, 8
    $region9: #{tpu_custom_call.1} parent=1 // pred_fallthru
      _
    // Predicated region
    $region10: #{tpu_custom_call.1} parent=1 // pred_check
      _
    $region11: #{tpu_custom_call.1} parent=1 // pred_check_branch
      %33 = sbr.rel (0) target = $region13
    $region12: #{tpu_custom_call.1} parent=1 // pred_region
      %34 = dma.done [#allocation3], 128
    $region13: #{tpu_custom_call.1} parent=1 // pred_fallthru
      _
    // Predicated region
    $region14: #{tpu_custom_call.1} parent=1 // pred_check
      _
    $region15: #{tpu_custom_call.1} parent=1 // pred_check_branch
      %36 = sbr.rel (0) target = $region17
    $region16: #{tpu_custom_call.1} parent=1 // pred_region
      %37 = dma.done [#allocation6], 2048
    $region17: #{tpu_custom_call.1} parent=1 // pred_fallthru
      _
    %v38 = vld [vmem:[#allocation2] sm:$0xff]
    %v39 = vld [vmem:[#allocation5] sm:$0xff]
    %v40 = vld [vmem:[#allocation5 + $0x8] sm:$0xff]
    %v41 = vld [vmem:[#allocation5 + $0x10] sm:$0xff]
    %v42 = vld [vmem:[#allocation5 + $0x18] sm:$0xff]
    %44 = vrot.lane.b32.xlu0 %v38, 127
    %v45 = vpop.permute.xlu0 %44
    %47 = vrot.lane.b32.xlu0 %v38, 126
    %v48 = vpop.permute.xlu0 %47
    %vm50 = vcmask 203776
    %v52 = vsel %vm50, %v39, 0
    %v55 = vsel %vm50, %v40, 0
    %v58 = vsel %vm50, %v41, 0
    %v61 = vsel %vm50, %v42, 0
    %vm63 = vcmask 1040384
    %v65 = vsel %vm63, 1.0, 0
    %67 = vmatprep.subr.mxu0 0.0
    %68 = vmatpush1.msra.mxu0 %v38
    %69 = vmatprep.subr.mxu0 0.0
    %70 = vmatpush1.msra.mxu0 %v45
    %71 = vmatprep.subr.mxu0 0.0
    %72 = vmatpush1.msra.mxu0 %v48
    %73 = vmatprep.subr.mxu0 0.0
    %74 = vmatpush1.msra.mxu0 %v65
    %75 = vmatprep.subr.mxu0 0.0
    %76 = vmatpush1.msra.mxu0 0.0
    %77 = vmatprep.subr.mxu0 0.0
    %78 = vmatpush1.msra.mxu0 0.0
    %79 = vmatprep.subr.mxu0 0.0
    %80 = vmatpush1.msra.mxu0 0.0
    %81 = vmatprep.subr.mxu0 0.0
    %82 = vmatpush1.msra.mxu0 0.0
    %83 = vmatprep.subr.mxu0 0.0
    %84 = vmatpush1.msra.mxu0 0.0
    %85 = vmatprep.subr.mxu0 0.0
    %86 = vmatpush1.msra.mxu0 0.0
    %87 = vmatprep.subr.mxu0 0.0
    %88 = vmatpush1.msra.mxu0 0.0
    %89 = vmatprep.subr.mxu0 0.0
    %90 = vmatpush1.msra.mxu0 0.0
    %91 = vmatprep.subr.mxu0 0.0
    %92 = vmatpush1.msra.mxu0 0.0
    %93 = vmatprep.subr.mxu0 0.0
    %94 = vmatpush1.msra.mxu0 0.0
    %95 = vmatprep.subr.mxu0 0.0
    %96 = vmatpush1.msra.mxu0 0.0
    %97 = vmatprep.subr.mxu0 0.0
    %98 = vmatpush1.msra.mxu0 0.0
    %99 = vmatprep.subr.mxu0 0.0
    %100 = vmatpush1.msra.mxu0 0.0
    %101 = vmatprep.subr.mxu0 0.0
    %102 = vmatpush1.msra.mxu0 0.0
    %103 = vmatprep.subr.mxu0 0.0
    %104 = vmatpush1.msra.mxu0 0.0
    %105 = vmatprep.subr.mxu0 0.0
    %106 = vmatpush1.msra.mxu0 0.0
    %107 = vmatprep.subr.mxu0 0.0
    %108 = vmatpush1.msra.mxu0 0.0
    %109 = vmatprep.subr.mxu0 0.0
    %110 = vmatpush1.msra.mxu0 0.0
    %111 = vmatprep.subr.mxu0 0.0
    %112 = vmatpush1.msra.mxu0 0.0
    %113 = vmatprep.subr.mxu0 0.0
    %114 = vmatpush1.msra.mxu0 0.0
    %115 = vmatprep.subr.mxu0 0.0
    %116 = vmatpush1.msra.mxu0 0.0
    %117 = vmatprep.subr.mxu0 0.0
    %118 = vmatpush1.msra.mxu0 0.0
    %119 = vmatprep.subr.mxu0 0.0
    %120 = vmatpush1.msra.mxu0 0.0
    %121 = vmatprep.subr.mxu0 0.0
    %122 = vmatpush1.msra.mxu0 0.0
    %123 = vmatprep.subr.mxu0 0.0
    %124 = vmatpush1.msra.mxu0 0.0
    %125 = vmatprep.subr.mxu0 0.0
    %126 = vmatpush1.msra.mxu0 0.0
    %127 = vmatprep.subr.mxu0 0.0
    %128 = vmatpush1.msra.mxu0 0.0
    %129 = vmatprep.subr.mxu0 0.0
    %130 = vmatpush1.msra.mxu0 0.0
    %131 = vmatprep.mubr.f32.mxu0 0.0
    %132 = vmatmul.mubr.f32.gmra.mrb[0].mxu0 %v52
    %v133 = vpop.f32.mrb[0].mxu0
    %v134 = vadd.f32 0.0, %v133
    %v135 = vpop.f32.mrb[0].mxu0
    %136 = vmatprep.mubr.f32.mxu0 0.0
    %137 = vmatmul.mubr.f32.gmra.mrb[0].mxu0 %v55
    %v138 = vpop.f32.mrb[0].mxu0
    %v139 = vadd.f32 0.0, %v138
    %v140 = vpop.f32.mrb[0].mxu0
    %141 = vmatprep.mubr.f32.mxu0 0.0
    %142 = vmatmul.mubr.f32.gmra.mrb[0].mxu0 %v58
    %v143 = vpop.f32.mrb[0].mxu0
    %v144 = vadd.f32 0.0, %v143
    %v145 = vpop.f32.mrb[0].mxu0
    %146 = vmatprep.mubr.f32.mxu0 0.0
    %147 = vmatmul.mubr.f32.gmra.mrb[0].mxu0 %v61
    %v148 = vpop.f32.mrb[0].mxu0
    %v149 = vadd.f32 0.0, %v148
    %v150 = vpop.f32.mrb[0].mxu0
    %151 = vdwg.mxu0
    %vm152 = vcmp.gt.f32.partialorder %v134, 0.0
    %vm153 = vcmp.gt.f32.partialorder %v139, 0.0
    %v154 = vmul.f32 %v134, 0.1
    %v155 = vmul.f32 %v139, 0.1
    %v156 = vsel %vm152, %v134, %v154
    %v157 = vsel %vm153, %v139, %v155
    %v158 = vadd.f32 %v156, %v144
    %v159 = vadd.f32 %v157, %v149
    %s160 = scalar_lea.vmem [#allocation5], 32
    %v161 = vld [vmem:[%s160] sm:$0xff]
    %v162 = vld [vmem:[%s160 + $0x8] sm:$0xff]
    %v163 = vld [vmem:[%s160 + $0x10] sm:$0xff]
    %v164 = vld [vmem:[%s160 + $0x18] sm:$0xff]
    %167 = vrot.lane.b32.xlu0 %v158, 126
    %v168 = vpop.permute.xlu0 %167
    %169 = vrot.lane.b32.xlu0 %v159, 126
    %v170 = vpop.permute.xlu0 %169
    %173 = vrot.lane.b32.xlu0 %v158, 124
    %v174 = vpop.permute.xlu0 %173
    %175 = vrot.lane.b32.xlu0 %v159, 124
    %v176 = vpop.permute.xlu0 %175
    %vm179 = vcmask 400384
    %v181 = vsel %vm179, %v161, 0
    %v184 = vsel %vm179, %v162, 0
    %v187 = vsel %vm179, %v163, 0
    %v190 = vsel %vm179, %v164, 0
    %192 = vmatprep.subr.mxu0 0.0
    %193 = vmatpush1.msra.mxu0 %v158
    %194 = vmatprep.subr.mxu0 0.0
    %195 = vmatpush1.msra.mxu0 %v159
    %196 = vmatprep.subr.mxu0 0.0
    %197 = vmatpush1.msra.mxu0 %v168
    %198 = vmatprep.subr.mxu0 0.0
    %199 = vmatpush1.msra.mxu0 %v170
    %200 = vmatprep.subr.mxu0 0.0
    %201 = vmatpush1.msra.mxu0 %v174
    %202 = vmatprep.subr.mxu0 0.0
    %203 = vmatpush1.msra.mxu0 %v176
    %204 = vmatprep.subr.mxu0 0.0
    %205 = vmatpush1.msra.mxu0 %v65
    %206 = vmatprep.subr.mxu0 0.0
    %207 = vmatpush1.msra.mxu0 0.0
    %208 = vmatprep.subr.mxu0 0.0
    %209 = vmatpush1.msra.mxu0 0.0
    %210 = vmatprep.subr.mxu0 0.0
    %211 = vmatpush1.msra.mxu0 0.0
    %212 = vmatprep.subr.mxu0 0.0
    %213 = vmatpush1.msra.mxu0 0.0
    %214 = vmatprep.subr.mxu0 0.0
    %215 = vmatpush1.msra.mxu0 0.0
    %216 = vmatprep.subr.mxu0 0.0
    %217 = vmatpush1.msra.mxu0 0.0
    %218 = vmatprep.subr.mxu0 0.0
    %219 = vmatpush1.msra.mxu0 0.0
    %220 = vmatprep.subr.mxu0 0.0
    %221 = vmatpush1.msra.mxu0 0.0
    %222 = vmatprep.subr.mxu0 0.0
    %223 = vmatpush1.msra.mxu0 0.0
    %224 = vmatprep.subr.mxu0 0.0
    %225 = vmatpush1.msra.mxu0 0.0
    %226 = vmatprep.subr.mxu0 0.0
    %227 = vmatpush1.msra.mxu0 0.0
    %228 = vmatprep.subr.mxu0 0.0
    %229 = vmatpush1.msra.mxu0 0.0
    %230 = vmatprep.subr.mxu0 0.0
    %231 = vmatpush1.msra.mxu0 0.0
    %232 = vmatprep.subr.mxu0 0.0
    %233 = vmatpush1.msra.mxu0 0.0
    %234 = vmatprep.subr.mxu0 0.0
    %235 = vmatpush1.msra.mxu0 0.0
    %236 = vmatprep.subr.mxu0 0.0
    %237 = vmatpush1.msra.mxu0 0.0
    %238 = vmatprep.subr.mxu0 0.0
    %239 = vmatpush1.msra.mxu0 0.0
    %240 = vmatprep.subr.mxu0 0.0
    %241 = vmatpush1.msra.mxu0 0.0
    %242 = vmatprep.subr.mxu0 0.0
    %243 = vmatpush1.msra.mxu0 0.0
    %244 = vmatprep.subr.mxu0 0.0
    %245 = vmatpush1.msra.mxu0 0.0
    %246 = vmatprep.subr.mxu0 0.0
    %247 = vmatpush1.msra.mxu0 0.0
    %248 = vmatprep.subr.mxu0 0.0
    %249 = vmatpush1.msra.mxu0 0.0
    %250 = vmatprep.subr.mxu0 0.0
    %251 = vmatpush1.msra.mxu0 0.0
    %252 = vmatprep.subr.mxu0 0.0
    %253 = vmatpush1.msra.mxu0 0.0
    %254 = vmatprep.subr.mxu0 0.0
    %255 = vmatpush1.msra.mxu0 0.0
    %256 = vmatprep.mubr.f32.mxu0 0.0
    %257 = vmatmul.mubr.f32.gmra.mrb[0].mxu0 %v181
    %v258 = vpop.f32.mrb[0].mxu0
    %v259 = vadd.f32 0.0, %v258
    %v260 = vpop.f32.mrb[0].mxu0
    %261 = vmatprep.mubr.f32.mxu0 0.0
    %262 = vmatmul.mubr.f32.gmra.mrb[0].mxu0 %v184
    %v263 = vpop.f32.mrb[0].mxu0
    %v264 = vadd.f32 0.0, %v263
    %v265 = vpop.f32.mrb[0].mxu0
    %266 = vmatprep.mubr.f32.mxu0 0.0
    %267 = vmatmul.mubr.f32.gmra.mrb[0].mxu0 %v187
    %v268 = vpop.f32.mrb[0].mxu0
    %v269 = vadd.f32 0.0, %v268
    %v270 = vpop.f32.mrb[0].mxu0
    %271 = vmatprep.mubr.f32.mxu0 0.0
    %272 = vmatmul.mubr.f32.gmra.mrb[0].mxu0 %v190
    %v273 = vpop.f32.mrb[0].mxu0
    %v274 = vadd.f32 0.0, %v273
    %v275 = vpop.f32.mrb[0].mxu0
    %276 = vdwg.mxu0
    %vm277 = vcmp.gt.f32.partialorder %v259, 0.0
    %vm278 = vcmp.gt.f32.partialorder %v264, 0.0
    %v279 = vmul.f32 %v259, 0.1
    %v280 = vmul.f32 %v264, 0.1
    %v281 = vsel %vm277, %v259, %v279
    %v282 = vsel %vm278, %v264, %v280
    %v283 = vadd.f32 %v281, %v269
    %v284 = vadd.f32 %v282, %v274
    %s285 = scalar_lea.vmem [#allocation5], 64
    %v286 = vld [vmem:[%s285] sm:$0xff]
    %v287 = vld [vmem:[%s285 + $0x8] sm:$0xff]
    %v288 = vld [vmem:[%s285 + $0x10] sm:$0xff]
    %v289 = vld [vmem:[%s285 + $0x18] sm:$0xff]
    %292 = vrot.lane.b32.xlu0 %v283, 125
    %v293 = vpop.permute.xlu0 %292
    %294 = vrot.lane.b32.xlu0 %v284, 125
    %v295 = vpop.permute.xlu0 %294
    %298 = vrot.lane.b32.xlu0 %v283, 122
    %v299 = vpop.permute.xlu0 %298
    %300 = vrot.lane.b32.xlu0 %v284, 122
    %v301 = vpop.permute.xlu0 %300
    %v305 = vsel %vm179, %v286, 0
    %v308 = vsel %vm179, %v287, 0
    %v311 = vsel %vm179, %v288, 0
    %v314 = vsel %vm179, %v289, 0
    %316 = vmatprep.subr.mxu0 0.0
    %317 = vmatpush1.msra.mxu0 %v283
    %318 = vmatprep.subr.mxu0 0.0
    %319 = vmatpush1.msra.mxu0 %v284
    %320 = vmatprep.subr.mxu0 0.0
    %321 = vmatpush1.msra.mxu0 %v293
    %322 = vmatprep.subr.mxu0 0.0
    %323 = vmatpush1.msra.mxu0 %v295
    %324 = vmatprep.subr.mxu0 0.0
    %325 = vmatpush1.msra.mxu0 %v299
    %326 = vmatprep.subr.mxu0 0.0
    %327 = vmatpush1.msra.mxu0 %v301
    %328 = vmatprep.subr.mxu0 0.0
    %329 = vmatpush1.msra.mxu0 %v65
    %330 = vmatprep.subr.mxu0 0.0
    %331 = vmatpush1.msra.mxu0 0.0
    %332 = vmatprep.subr.mxu0 0.0
    %333 = vmatpush1.msra.mxu0 0.0
    %334 = vmatprep.subr.mxu0 0.0
    %335 = vmatpush1.msra.mxu0 0.0
    %336 = vmatprep.subr.mxu0 0.0
    %337 = vmatpush1.msra.mxu0 0.0
    %338 = vmatprep.subr.mxu0 0.0
    %339 = vmatpush1.msra.mxu0 0.0
    %340 = vmatprep.subr.mxu0 0.0
    %341 = vmatpush1.msra.mxu0 0.0
    %342 = vmatprep.subr.mxu0 0.0
    %343 = vmatpush1.msra.mxu0 0.0
    %344 = vmatprep.subr.mxu0 0.0
    %345 = vmatpush1.msra.mxu0 0.0
    %346 = vmatprep.subr.mxu0 0.0
    %347 = vmatpush1.msra.mxu0 0.0
    %348 = vmatprep.subr.mxu0 0.0
    %349 = vmatpush1.msra.mxu0 0.0
    %350 = vmatprep.subr.mxu0 0.0
    %351 = vmatpush1.msra.mxu0 0.0
    %352 = vmatprep.subr.mxu0 0.0
    %353 = vmatpush1.msra.mxu0 0.0
    %354 = vmatprep.subr.mxu0 0.0
    %355 = vmatpush1.msra.mxu0 0.0
    %356 = vmatprep.subr.mxu0 0.0
    %357 = vmatpush1.msra.mxu0 0.0
    %358 = vmatprep.subr.mxu0 0.0
    %359 = vmatpush1.msra.mxu0 0.0
    %360 = vmatprep.subr.mxu0 0.0
    %361 = vmatpush1.msra.mxu0 0.0
    %362 = vmatprep.subr.mxu0 0.0
    %363 = vmatpush1.msra.mxu0 0.0
    %364 = vmatprep.subr.mxu0 0.0
    %365 = vmatpush1.msra.mxu0 0.0
    %366 = vmatprep.subr.mxu0 0.0
    %367 = vmatpush1.msra.mxu0 0.0
    %368 = vmatprep.subr.mxu0 0.0
    %369 = vmatpush1.msra.mxu0 0.0
    %370 = vmatprep.subr.mxu0 0.0
    %371 = vmatpush1.msra.mxu0 0.0
    %372 = vmatprep.subr.mxu0 0.0
    %373 = vmatpush1.msra.mxu0 0.0
    %374 = vmatprep.subr.mxu0 0.0
    %375 = vmatpush1.msra.mxu0 0.0
    %376 = vmatprep.subr.mxu0 0.0
    %377 = vmatpush1.msra.mxu0 0.0
    %378 = vmatprep.subr.mxu0 0.0
    %379 = vmatpush1.msra.mxu0 0.0
    %380 = vmatprep.mubr.f32.mxu0 0.0
    %381 = vmatmul.mubr.f32.gmra.mrb[0].mxu0 %v305
    %v382 = vpop.f32.mrb[0].mxu0
    %v383 = vadd.f32 0.0, %v382
    %v384 = vpop.f32.mrb[0].mxu0
    %385 = vmatprep.mubr.f32.mxu0 0.0
    %386 = vmatmul.mubr.f32.gmra.mrb[0].mxu0 %v308
    %v387 = vpop.f32.mrb[0].mxu0
    %v388 = vadd.f32 0.0, %v387
    %v389 = vpop.f32.mrb[0].mxu0
    %390 = vmatprep.mubr.f32.mxu0 0.0
    %391 = vmatmul.mubr.f32.gmra.mrb[0].mxu0 %v311
    %v392 = vpop.f32.mrb[0].mxu0
    %v393 = vadd.f32 0.0, %v392
    %v394 = vpop.f32.mrb[0].mxu0
    %395 = vmatprep.mubr.f32.mxu0 0.0
    %396 = vmatmul.mubr.f32.gmra.mrb[0].mxu0 %v314
    %v397 = vpop.f32.mrb[0].mxu0
    %v398 = vadd.f32 0.0, %v397
    %v399 = vpop.f32.mrb[0].mxu0
    %400 = vdwg.mxu0
    %vm401 = vcmp.gt.f32.partialorder %v383, 0.0
    %vm402 = vcmp.gt.f32.partialorder %v388, 0.0
    %v403 = vmul.f32 %v383, 0.1
    %v404 = vmul.f32 %v388, 0.1
    %v405 = vsel %vm401, %v383, %v403
    %v406 = vsel %vm402, %v388, %v404
    %v407 = vadd.f32 %v405, %v393
    %v408 = vadd.f32 %v406, %v398
    %s409 = scalar_lea.vmem [#allocation5], 96
    %v410 = vld [vmem:[%s409] sm:$0xff]
    %v411 = vld [vmem:[%s409 + $0x8] sm:$0xff]
    %413 = vset.pattern.permute.xlu0 0
    %414 = vperm.xlu0 %413, %v410
    %v415 = vpop.permute.xlu0 %414
    %418 = vset.pattern.permute.xlu0 0
    %419 = vperm.xlu0 %418, %v411
    %v420 = vpop.permute.xlu0 %419
    %v422 = vmul.f32 %v415, %v407
    %v423 = vmul.f32 %v420, %v408
    %vm424 = vcmask 162816
    %v425 = vsel %vm424, %v422, 0.0
    %v426 = vrot.slane %v425, 4
    %v427 = vadd.f32 %v425, %v426
    %v428 = vrot.slane %v427, 2
    %v429 = vadd.f32 %v427, %v428
    %v430 = vrot.slane %v429, 1
    %v431 = vadd.f32 %v429, %v430
    %v432 = vsel %vm424, %v423, 0.0
    %v433 = vrot.slane %v432, 4
    %v434 = vadd.f32 %v432, %v433
    %v435 = vrot.slane %v434, 2
    %v436 = vadd.f32 %v434, %v435
    %v437 = vrot.slane %v436, 1
    %v438 = vadd.f32 %v436, %v437
    %439 = vrot.lane.b32.xlu0 %v410, 127
    %v440 = vpop.permute.xlu0 %439
    %s441 = vtos %v440
    %v442 = vstv %s441
    %v444 = vadd.f32 %v431, %v442
    %v445 = vadd.f32 %v438, %v442
    %vm448 = vcmask 1041409
    %v449 = vsel %vm448, %v445, %v444
    %vm451 = vcmask 156672
    %452 = vst.msk [vmem:[#allocation7] sm:$0x3] %vm451, %v449
    // Predicated region
    $region18: #{tpu_custom_call.1} parent=1 // pred_check
      _
    $region19: #{tpu_custom_call.1} parent=1 // pred_check_branch
      %454 = sbr.rel (0) target = $region21
    $region20: #{tpu_custom_call.1} parent=1 // pred_region
      %s456 = ssub.s32 32, 32
      %457 = vsyncadd [#allocation4], %s456
      %s459 = sshll.u32 [#allocation7], 4
      %s460 = int_to_ptr.vmem [resolvable:$true] %s459
      %462 = dma.vmem_to_hbm [thread:$0]  %s460, 32, %s2, [#allocation4]
    $region21: #{tpu_custom_call.1} parent=1 // pred_fallthru
      _
    // Predicated region
    $region22: #{tpu_custom_call.1} parent=1 // pred_check
      _
    $region23: #{tpu_custom_call.1} parent=1 // pred_check_branch
      %464 = sbr.rel (0) target = $region25
    $region24: #{tpu_custom_call.1} parent=1 // pred_region
      %465 = dma.done [#allocation4], 32
    $region25: #{tpu_custom_call.1} parent=1 // pred_fallthru
      _
    %466 = vsyncpa [#allocation3], 1
    %467 = vsyncpa [#allocation6], 1
    %468 = vsyncpa [#allocation4], 1

</llo_original>
